<compile_context>
chip_gen: v5e
topology: v5e:2x2
jax: 0.10.0
libtpu: 0.0.40
codegen_flags: <defaults>
</compile_context>

<pallas_src>
import functools

import jax
import jax.numpy as jnp
from jax.experimental import pallas as pl
from jax.experimental.pallas import tpu as pltpu


def _nnpu_reduce_kernel(x_ref, y_ref, acc_ref):
    """Per-tile fused reduction for nnPU loss.

    acc[j, c]  (j < C, c < C) = sum_n CE(x_n, c) * [y_n == j]
    acc[C, c]  (c < C)        = sum_n CE(x_n, c) * [y_n == -1]
    acc[j, C]  (j < C)        = sum_n [y_n == j]
    acc[C, C]                 = sum_n [y_n == -1]
    where CE(x_n, c) = logsumexp(x_n) - x_n[c].
    """
    @pl.when(pl.program_id(1) == 0)
    def _():
        acc_ref[...] = jnp.zeros_like(acc_ref)

    x = x_ref[...]                                # (C, TN) float32
    y = y_ref[...]                                # (1, TN) int32
    c, tn = x.shape

    # Per-sample CE against every candidate class (log-softmax over sublanes).
    m = jnp.max(x, axis=0, keepdims=True)                              # (1, TN)
    lse = m + jnp.log(jnp.sum(jnp.exp(x - m), axis=0, keepdims=True))  # (1, TN)
    losses = lse - x                                                   # (C, TN)

    # Mask matrix: rows 0..C-1 are per-class indicators, row C is "unlabeled".
    # (y == -1 can never match a non-negative class id; padding uses y == -2
    #  which matches nothing.)
    row_iota = jax.lax.broadcasted_iota(jnp.int32, (c + 1, tn), 0)
    targets = jnp.where(row_iota == c, -1, row_iota)
    masks = (y == targets).astype(jnp.float32)                         # (C+1, TN)

    # Value matrix: losses plus a row of ones (so counts fall out of the same
    # matmul).  Single MXU contraction over the lane/N axis.
    vals = jnp.concatenate(
        [losses, jnp.ones((1, tn), jnp.float32)], axis=0)              # (C+1, TN)

    acc_ref[...] += jax.lax.dot_general(
        masks, vals, (((1,), (1,)), ((), ())),
        preferred_element_type=jnp.float32)                            # (C+1, C+1)


def _run_reductions(x, y, tile_n=4096, num_splits=2):
    n, c = x.shape
    xt = x.T.astype(jnp.float32)                  # (C, N): N on the lane axis
    y2 = y.reshape(1, n).astype(jnp.int32)        # (1, N)

    # Pad N so each split gets an integer number of lane-aligned tiles.
    per_split = -(-n // num_splits)
    per_split = -(-per_split // 128) * 128
    eff_tile = min(tile_n, per_split)
    per_split = -(-per_split // eff_tile) * eff_tile
    n_pad = per_split * num_splits
    if n_pad != n:
        pad = n_pad - n
        xt = jnp.pad(xt, ((0, 0), (0, pad)))
        y2 = jnp.pad(y2, ((0, 0), (0, pad)), constant_values=-2)  # sentinel
    tiles_per_split = per_split // eff_tile

    grid = (num_splits, tiles_per_split)
    out_shape = jax.ShapeDtypeStruct((num_splits, c + 1, c + 1), jnp.float32)

    cost = pl.CostEstimate(
        flops=2 * n_pad * (c + 1) * (c + 1) + 8 * n_pad * c,
        transcendentals=n_pad * (c + 1),
        bytes_accessed=n_pad * (4 * c + 4) + 4 * num_splits * (c + 1) * (c + 1),
    )

    return pl.pallas_call(
        _nnpu_reduce_kernel,
        out_shape=out_shape,
        grid_spec=pl.GridSpec(
            grid=grid,
            in_specs=[
                pl.BlockSpec((c, eff_tile),
                             lambda s, i: (0, s * tiles_per_split + i)),
                pl.BlockSpec((1, eff_tile),
                             lambda s, i: (0, s * tiles_per_split + i)),
            ],
            out_specs=pl.BlockSpec((None, c + 1, c + 1),
                                   lambda s, i: (s, 0, 0)),
        ),
        compiler_params=pltpu.CompilerParams(
            dimension_semantics=("parallel", "arbitrary")),
        cost_estimate=cost,
    )(xt, y2)


@functools.partial(jax.jit, static_argnames=("prior", "alpha", "beta", "gamma",
                                             "tile_n", "num_splits"))
def nnpu_loss(x, y, prior, alpha=1.0, beta=0.0, gamma=1.0, tile_n=4096,
              num_splits=2):
    """JAX/Pallas port of nnPUloss.forward(x, y).

    x: (N, C) float32 logits.  y: (N,) int labels, -1 == unlabeled.
    prior: tuple of per-class priors (len == C).
    """
    # TODO(synk): `gamma` is unused in the reference forward pass as well.
    n, c = x.shape
    n_cls = len(prior)
    assert n_cls == c

    parts = _run_reductions(x, y, tile_n=tile_n, num_splits=num_splits)
    acc = jnp.sum(parts, axis=0)                  # (C+1, C+1)

    s_cls = acc[:c, :c]                           # s_cls[j, i] = sum CE(.,i)*[y==j]
    s_unl = acc[c, :c]                            # s_unl[i]    = sum CE(.,i)*[y==-1]
    cnt_cls = acc[:c, c]                          # per-class counts
    cnt_unl = acc[c, c]                           # unlabeled count

    n_unlabeled = jnp.maximum(1.0, cnt_unl)
    n_inds_y = jnp.maximum(1.0, cnt_cls)          # (C,)

    # Faithful reproduction of the reference loop: `loss` is OVERWRITTEN every
    # iteration, so only the i = n_cls - 1 contribution survives.
    loss = None
    for i in range(n_cls):
        unrisk_i = s_unl[i] / n_unlabeled
        nn_risk_y = jnp.float32(0.0)
        for j in range(n_cls):
            if j != i:
                nn_risk_y = nn_risk_y + s_cls[j, i] / n_inds_y[j] * prior[j]
        loss = s_cls[i, i] / n_inds_y[i] * prior[i]
        loss = loss + alpha * jnp.maximum(unrisk_i - nn_risk_y, beta) / n_cls
    return loss


def _reference_loss(x, y, prior, alpha=1.0, beta=0.0):
    """Pure-JAX reference mirroring the PyTorch code (for a sanity check)."""
    n_cls = len(prior)
    unlabeled = (y == -1).astype(jnp.float32)
    n_unl = jnp.maximum(1.0, jnp.sum(unlabeled))
    inds = [(y == i).astype(jnp.float32) * (1.0 - unlabeled) for i in range(n_cls)]
    n_inds = [jnp.maximum(1.0, jnp.sum(m)) for m in inds]
    lse = jax.scipy.special.logsumexp(x, axis=-1)
    loss = None
    for i in range(n_cls):
        losses = lse - x[:, i]
        unrisk_i = jnp.sum(losses * unlabeled) / n_unl
        nn_risk = 0.0
        for j in range(n_cls):
            if j != i:
                nn_risk += jnp.sum(losses * inds[j]) / n_inds[j] * prior[j]
        loss = jnp.sum(losses * inds[i]) / n_inds[i] * prior[i]
        loss = loss + alpha * jnp.maximum(unrisk_i - nn_risk, beta) / n_cls
    return loss


if __name__ == "__main__":
    key = jax.random.PRNGKey(0)
    kx, ky = jax.random.split(key)

    # Small, deterministic test shapes.  N is deliberately NOT lane-aligned to
    # exercise the sentinel-padding path.
    N, C = 384, 4
    prior = (0.1, 0.2, 0.3, 0.4)

    x = jax.random.normal(kx, (N, C), dtype=jnp.float32)
    # labels in {-1, 0, 1, 2, 3}; -1 == unlabeled
    y = jax.random.randint(ky, (N,), minval=-1, maxval=C, dtype=jnp.int32)

    loss = nnpu_loss(x, y, prior, alpha=1.0, beta=0.0, gamma=1.0)
    loss = jax.block_until_ready(loss)

    ref = _reference_loss(x, y, prior, alpha=1.0, beta=0.0)
    assert jnp.allclose(loss, ref, rtol=1e-5, atol=1e-5), (loss, ref)

    print("KERNEL_OK")
</pallas_src>

<mosaic_0001>
module attributes {stable_mosaic.version = 11 : i64} {
  func.func @_nnpu_reduce_kernel(%arg0: i32, %arg1: i32, %arg2: memref<4x256xf32, #tpu.memory_space<vmem>>, %arg3: memref<1x256xi32, #tpu.memory_space<vmem>>, %arg4: memref<1x5x5xf32, #tpu.memory_space<vmem>>) attributes {dimension_semantics = [#tpu.dimension_semantics<parallel>, #tpu.dimension_semantics<arbitrary>], iteration_bounds = array<i64: 2, 1>, scalar_prefetch = 0 : i64, scratch_operands = 0 : i64, tpu.core_type = #tpu.core_type<tc>, window_params = [{transform_indices = @transform_0, window_bounds = array<i64: 4, 256>}, {transform_indices = @transform_1, window_bounds = array<i64: 1, 256>}, {transform_indices = @transform_2, window_bounds = array<i64: 1, 5, 5>}]} {
    %c0_i32 = arith.constant 0 : i32
    %0 = arith.cmpi eq, %arg1, %c0_i32 : i32
    %1 = arith.extui %0 : i1 to i32
    %c0_i32_0 = arith.constant 0 : i32
    %2 = arith.cmpi ne, %1, %c0_i32_0 : i32
    scf.if %2 {
      %cst_13 = arith.constant 0.000000e+00 : f32
      %34 = vector.broadcast %cst_13 : f32 to vector<5x5xf32>
      %c0_14 = arith.constant 0 : index
      %c0_15 = arith.constant 0 : index
      %c0_16 = arith.constant 0 : index
      %35 = vector.load %arg4[%c0_14, %c0_15, %c0_16] : memref<1x5x5xf32, #tpu.memory_space<vmem>>, vector<1x5x5xf32>
      %36 = vector.shape_cast %35 : vector<1x5x5xf32> to vector<5x5xf32>
      %37 = vector.shape_cast %34 : vector<5x5xf32> to vector<1x5x5xf32>
      tpu.vector_store %arg4[%c0_14, %c0_15, %c0_16], %37 {strides = array<i32>} : memref<1x5x5xf32, #tpu.memory_space<vmem>>, vector<1x5x5xf32>,
    } else {
    }
    %c0 = arith.constant 0 : index
    %c0_1 = arith.constant 0 : index
    %3 = vector.load %arg2[%c0, %c0_1] : memref<4x256xf32, #tpu.memory_space<vmem>>, vector<4x256xf32>
    %c0_2 = arith.constant 0 : index
    %c0_3 = arith.constant 0 : index
    %4 = vector.load %arg3[%c0_2, %c0_3] : memref<1x256xi32, #tpu.memory_space<vmem>>, vector<1x256xi32>
    %cst = arith.constant dense<0xFF800000> : vector<256xf32>
    %5 = vector.multi_reduction <maximumf>, %3, %cst [0] : vector<4x256xf32> to vector<256xf32>
    %6 = vector.shape_cast %5 : vector<256xf32> to vector<1x256xf32>
    %7 = vector.broadcast %6 : vector<1x256xf32> to vector<4x256xf32>
    %8 = arith.subf %3, %7 : vector<4x256xf32>
    %9 = math.exp %8 : vector<4x256xf32>
    %cst_4 = arith.constant dense<0.000000e+00> : vector<256xf32>
    %10 = vector.multi_reduction <add>, %9, %cst_4 [0] : vector<4x256xf32> to vector<256xf32>
    %11 = vector.shape_cast %10 : vector<256xf32> to vector<1x256xf32>
    %12 = math.log %11 : vector<1x256xf32>
    %13 = arith.addf %6, %12 : vector<1x256xf32>
    %14 = vector.broadcast %13 : vector<1x256xf32> to vector<4x256xf32>
    %15 = arith.subf %14, %3 : vector<4x256xf32>
    %16 = tpu.iota {dimensions = array<i32: 0>} : vector<5x256xi32>
    %c4_i32 = arith.constant 4 : i32
    %17 = vector.broadcast %c4_i32 : i32 to vector<5x256xi32>
    %18 = arith.cmpi eq, %16, %17 : vector<5x256xi32>
    %c-1_i32 = arith.constant -1 : i32
    %19 = vector.broadcast %c-1_i32 : i32 to vector<5x256xi32>
    %20 = arith.select %18, %19, %16 : vector<5x256xi1>, vector<5x256xi32>
    %21 = vector.broadcast %4 : vector<1x256xi32> to vector<5x256xi32>
    %22 = arith.cmpi eq, %21, %20 : vector<5x256xi32>
    %23 = arith.extui %22 : vector<5x256xi1> to vector<5x256xi32>
    %24 = arith.sitofp %23 : vector<5x256xi32> to vector<5x256xf32>
    %cst_5 = arith.constant 1.000000e+00 : f32
    %25 = vector.broadcast %cst_5 : f32 to vector<1x256xf32>
    %26 = tpu.concatenate %15, %25 in 0 : vector<4x256xf32>, vector<1x256xf32> -> vector<5x256xf32>
    %c0_6 = arith.constant 0 : index
    %c0_7 = arith.constant 0 : index
    %c0_8 = arith.constant 0 : index
    %27 = vector.load %arg4[%c0_6, %c0_7, %c0_8] : memref<1x5x5xf32, #tpu.memory_space<vmem>>, vector<1x5x5xf32>
    %28 = vector.shape_cast %27 : vector<1x5x5xf32> to vector<5x5xf32>
    %cst_9 = arith.constant dense<0.000000e+00> : vector<5x5xf32>
    %29 = tpu.matmul %24, %26, %cst_9 {dimension_numbers = #tpu.dot_dimension_numbers<[1], [1], [0], [0], [0, 0, 1, 0], [], []>} : vector<5x256xf32>, vector<5x256xf32>, vector<5x5xf32> -> vector<5x5xf32>
    %30 = arith.addf %28, %29 : vector<5x5xf32>
    %c0_10 = arith.constant 0 : index
    %c0_11 = arith.constant 0 : index
    %c0_12 = arith.constant 0 : index
    %31 = vector.load %arg4[%c0_10, %c0_11, %c0_12] : memref<1x5x5xf32, #tpu.memory_space<vmem>>, vector<1x5x5xf32>
    %32 = vector.shape_cast %31 : vector<1x5x5xf32> to vector<5x5xf32>
    %33 = vector.shape_cast %30 : vector<5x5xf32> to vector<1x5x5xf32>
    tpu.vector_store %arg4[%c0_10, %c0_11, %c0_12], %33 {strides = array<i32>} : memref<1x5x5xf32, #tpu.memory_space<vmem>>, vector<1x5x5xf32>,
    return
  }
  func.func @transform_0(%arg0: i32, %arg1: i32) -> (i32, i32) {
    %c1_i32 = arith.constant 1 : i32
    %0 = arith.muli %arg0, %c1_i32 : i32
    %1 = arith.addi %0, %arg1 : i32
    %c0_i32 = arith.constant 0 : i32
    %c0_i32_0 = arith.constant 0 : i32
    return %c0_i32, %1 : i32, i32
  }
  func.func @transform_1(%arg0: i32, %arg1: i32) -> (i32, i32) {
    %c1_i32 = arith.constant 1 : i32
    %0 = arith.muli %arg0, %c1_i32 : i32
    %1 = arith.addi %0, %arg1 : i32
    %c0_i32 = arith.constant 0 : i32
    %c0_i32_0 = arith.constant 0 : i32
    return %c0_i32, %1 : i32, i32
  }
  func.func @transform_2(%arg0: i32, %arg1: i32) -> (i32, i32, i32) {
    %c0_i32 = arith.constant 0 : i32
    %c0_i32_0 = arith.constant 0 : i32
    %c0_i32_1 = arith.constant 0 : i32
    return %arg0, %c0_i32, %c0_i32_0 : i32, i32, i32
  }
}

</mosaic_0001>

<llo_original>
// kernel: nnpu_loss.1
$region0: #{nnpu_loss.1}
  #allocation0 [shape = 'u32[]', space=smem, size = 0x4, offset = 0x4, fixed_abs, tag = 'smem constant byte address 0x4 - core index']
  #allocation1 [shape = 'u32[72,128]{1,0:T(1,128)}', space=vmem, size = 0x9000, scoped, tag = 'internal scratch']
  %s0 = inlined_call_operand.vmem [shape: f32[4,512], index: 0, kind: input, shape index: {}]
  %s1 = inlined_call_operand.vmem [shape: s32[1,512], index: 1, kind: input, shape index: {}]
  %s2 = inlined_call_operand.vmem [shape: f32[2,5,5], index: 2, kind: output, shape index: {}]
  %s3 = sld [smem:[#allocation0]]
  $region45: #{nnpu_loss.1} parent=0
    _
  %s5 = ssub.s32 1, %s3
  %s6 = scalar_select 0, %s5, %s3
  loop: start=0, step=1, limit=4
  $region2: #{nnpu_loss.1} parent=0 // loop_pre_header
    _
  $region3: #{nnpu_loss.1} parent=0 // loop_header
    %s8 = sphi 0, %s12
    %p9 = scmp.ge.s32.totalorder %s8, 4
    %s15 = sphi 0, %s27
    %s16 = sphi 0, %s23
    %s17 = sphi 0, %s15
    %s18 = sphi 0, %s16
    %s19 = sphi 0, %s17
    %s20 = sphi 0, %s18
    %s32 = sphi 0, %s34
    %s35 = sphi 0, %s32
    %s36 = sphi 0, %s35
    %s52 = sphi 0, %s36
    %s60 = sphi 0, %s62
    %s63 = sphi 0, %s60
    %s64 = sphi 0, %s63
    %s80 = sphi 0, %s64
    %s86 = sphi 0, %s88
    %s89 = sphi 0, %s86
    %s90 = sphi 0, %s89
    %s106 = sphi 0, %s90
  $region4: #{nnpu_loss.1} parent=0 // loop_header_branch
    %11 = sbr.rel (%p9) target = $region8
  $region5: #{nnpu_loss.1} parent=0 // loop_body
    %s13 = ssub.s32 %s8, 1
    %s14 = ssub.s32 %s8, 2
    %s21 = sadd.s32 1, %s16
    %p22 = scmp.ge.s32.totalorder %s21, 1
    %s23 = scalar_select %p22, 0, %s21
    %s24 = sadd.s32 1, %s15
    %s25 = scalar_select %p22, %s24, %s15
    %p26 = scmp.ge.s32.totalorder %s25, 2
    %s27 = scalar_select %p26, 0, %s25
    %s28 = sadd.s32 %s15, %s16
    %s29 = sadd.s32 %s27, %s23
    %s30 = ssub.s32 %s28, %s29
    %p31 = scmp.eq.s32.totalorder %s30, 0
    %s33 = sadd.s32 %s32, 1
    %s34 = scalar_select %p31, %s32, %s33
    %p37 = pneg %p31
    %p38 = scmp.eq.s32.totalorder %s8, 1
    %p39 = por %p37, %p38
    %p40 = scmp.ne.s32.totalorder %s32, %s35
    %p41 = scmp.eq.s32.totalorder %s8, 0
    %p42 = por %p40, %p41
    %p43 = scmp.ne.s32.totalorder %s32, %s35
    %p44 = scmp.eq.s32.totalorder %s13, 1
    %p45 = por %p43, %p44
    %p46 = scmp.ne.s32.totalorder %s35, %s36
    %p47 = scmp.eq.s32.totalorder %s13, 0
    %p48 = por %p46, %p47
    %p49 = scmp.ne.s32.totalorder %s35, %s36
    %p50 = scmp.eq.s32.totalorder %s14, 1
    %p51 = por %p49, %p50
    %p53 = scmp.ne.s32.totalorder %s36, %s52
    %p54 = scmp.eq.s32.totalorder %s14, 0
    %p55 = por %p53, %p54
    %s56 = sadd.s32 %s15, %s16
    %s57 = sadd.s32 %s27, %s23
    %s58 = ssub.s32 %s56, %s57
    %p59 = scmp.eq.s32.totalorder %s58, 0
    %s61 = sadd.s32 %s60, 1
    %s62 = scalar_select %p59, %s60, %s61
    %p65 = pneg %p59
    %p66 = scmp.eq.s32.totalorder %s8, 1
    %p67 = por %p65, %p66
    %p68 = scmp.ne.s32.totalorder %s60, %s63
    %p69 = scmp.eq.s32.totalorder %s8, 0
    %p70 = por %p68, %p69
    %p71 = scmp.ne.s32.totalorder %s60, %s63
    %p72 = scmp.eq.s32.totalorder %s13, 1
    %p73 = por %p71, %p72
    %p74 = scmp.ne.s32.totalorder %s63, %s64
    %p75 = scmp.eq.s32.totalorder %s13, 0
    %p76 = por %p74, %p75
    %p77 = scmp.ne.s32.totalorder %s63, %s64
    %p78 = scmp.eq.s32.totalorder %s14, 1
    %p79 = por %p77, %p78
    %p81 = scmp.ne.s32.totalorder %s64, %s80
    %p82 = scmp.eq.s32.totalorder %s14, 0
    %p83 = por %p81, %p82
    %s84 = ssub.s32 %s15, %s27
    %p85 = scmp.eq.s32.totalorder %s84, 0
    %s87 = sadd.s32 %s86, 1
    %s88 = scalar_select %p85, %s86, %s87
    %p91 = pneg %p85
    %p92 = scmp.eq.s32.totalorder %s8, 1
    %p93 = por %p91, %p92
    %p94 = scmp.ne.s32.totalorder %s86, %s89
    %p95 = scmp.eq.s32.totalorder %s8, 0
    %p96 = por %p94, %p95
    %p97 = scmp.ne.s32.totalorder %s86, %s89
    %p98 = scmp.eq.s32.totalorder %s13, 1
    %p99 = por %p97, %p98
    %p100 = scmp.ne.s32.totalorder %s89, %s90
    %p101 = scmp.eq.s32.totalorder %s13, 0
    %p102 = por %p100, %p101
    %p103 = scmp.ne.s32.totalorder %s89, %s90
    %p104 = scmp.eq.s32.totalorder %s14, 1
    %p105 = por %p103, %p104
    %p107 = scmp.ne.s32.totalorder %s90, %s106
    %p108 = scmp.eq.s32.totalorder %s14, 0
    %p109 = por %p107, %p108
    %p110 = scmp.le.s32.totalorder 1, %s8
    %p111 = scmp.lt.s32.totalorder %s8, 3
    %p112 = pnand %p110, %p111
    %p113 = pneg %p112
    // Predicated region
    $region9: #{nnpu_loss.1} parent=5 // pred_check
      _
    $region10: #{nnpu_loss.1} parent=5 // pred_check_branch
      %115 = sbr.rel (%p112) target = $region12
    $region11: #{nnpu_loss.1} parent=5 // pred_region
      %s116 = ssub.s32 %s8, 1
    $region12: #{nnpu_loss.1} parent=5 // pred_fallthru
      _
    %p117 = scmp.lt.s32.totalorder %s8, 2
    // Predicated region
    $region13: #{nnpu_loss.1} parent=5 // pred_check
      %p118 = pneg %p117
    $region14: #{nnpu_loss.1} parent=5 // pred_check_branch
      %120 = sbr.rel (%p118) target = $region16
    $region15: #{nnpu_loss.1} parent=5 // pred_region
      // Predicated region
      $region17: #{nnpu_loss.1} parent=15 // pred_check
        %p121 = pneg %p42
      $region18: #{nnpu_loss.1} parent=15 // pred_check_branch
        %123 = sbr.rel (%p121) target = $region20
      $region19: #{nnpu_loss.1} parent=15 // pred_region
        %s124 = sadd.s32 %s15, %s16
        %s125 = smul.u32 2, %s124
        %p126 = scmp.lt.s32.totalorder %s125, 3
        %s127 = scalar_select %p126, %s125, 3
        %s128 = smul.addr %s127, 4
        %s129 = scalar_lea.vmem %s0, %s128
        %s130 = sadd.s32 %s15, %s16
        %s131 = smul.u32 2, %s130
      $region20: #{nnpu_loss.1} parent=15 // pred_fallthru
        _
      // Predicated region
      $region21: #{nnpu_loss.1} parent=15 // pred_check
        %p132 = pneg %p70
      $region22: #{nnpu_loss.1} parent=15 // pred_check_branch
        %134 = sbr.rel (%p132) target = $region24
      $region23: #{nnpu_loss.1} parent=15 // pred_region
        %s135 = sadd.s32 %s15, %s16
        %s136 = smul.u32 2, %s135
        %p137 = scmp.lt.s32.totalorder %s136, 3
        %s138 = scalar_select %p137, %s136, 3
        %s139 = scalar_lea.vmem %s1, %s138
        %s140 = sadd.s32 %s15, %s16
        %s141 = smul.u32 2, %s140
      $region24: #{nnpu_loss.1} parent=15 // pred_fallthru
        _
    $region16: #{nnpu_loss.1} parent=5 // pred_fallthru
      _
    %p142 = scmp.le.s32.totalorder 1, %s8
    %p143 = scmp.lt.s32.totalorder %s8, 3
    %p144 = pnand %p142, %p143
    %p145 = pneg %p144
    // Predicated region
    $region25: #{nnpu_loss.1} parent=5 // pred_check
      _
    $region26: #{nnpu_loss.1} parent=5 // pred_check_branch
      %147 = sbr.rel (%p144) target = $region28
    $region27: #{nnpu_loss.1} parent=5 // pred_region
      %s148 = ssub.s32 %s8, 1
      %s149 = sadd.s32 %s17, %s18
      %s150 = smul.u32 2, %s149
      %p151 = scmp.lt.s32.totalorder %s150, 3
      %s152 = scalar_select %p151, %s150, 3
      %s153 = smul.addr %s152, 4
      %s154 = scalar_lea.vmem %s0, %s153
      %p155 = pneg %p48
      %p156 = pneg %p45
      %s157 = sadd.s32 %s17, %s18
      %s158 = smul.u32 2, %s157
      %p159 = scmp.lt.s32.totalorder %s158, 3
      %s160 = scalar_select %p159, %s158, 3
      %s161 = scalar_lea.vmem %s1, %s160
      %p162 = pneg %p76
      %p163 = pneg %p73
      %p164 = pneg %p102
      %p165 = pneg %p99
      %p166 = scmp.lt.s32.totalorder %s17, 1
      %s167 = scalar_select %p166, %s17, 1
      %s168 = smul.addr %s167, 8
      %s169 = scalar_lea.vmem %s2, %s168
      %s170 = sadd.s32 %s17, %s18
      %s171 = smul.u32 2, %s170
      %p172 = scmp.lt.s32.totalorder %s171, 3
      %s173 = scalar_select %p172, %s171, 3
      %s174 = smul.addr %s173, 4
      %s175 = scalar_lea.vmem %s0, %s174
      %s176 = sadd.s32 %s17, %s18
      %s177 = smul.u32 2, %s176
      %s178 = sadd.s32 %s17, %s18
      %s179 = smul.u32 2, %s178
      %p180 = scmp.lt.s32.totalorder %s179, 3
      %s181 = scalar_select %p180, %s179, 3
      %s182 = scalar_lea.vmem %s1, %s181
      %s183 = sadd.s32 %s17, %s18
      %s184 = smul.u32 2, %s183
      %p185 = scmp.lt.s32.totalorder %s17, 1
      %s186 = scalar_select %p185, %s17, 1
      %s187 = smul.addr %s186, 8
      %s188 = scalar_lea.vmem %s2, %s187
      %p189 = scmp.eq.s32.totalorder %s18, 0
      // Predicated region
      $region29: #{nnpu_loss.1} parent=27 // pred_check
        %p190 = pneg %p189
      $region30: #{nnpu_loss.1} parent=27 // pred_check_branch
        %192 = sbr.rel (%p190) target = $region32
      $region31: #{nnpu_loss.1} parent=27 // pred_region
        %vm193 = vcmask 36864
        %194 = vst.msk [vmem:[%s188] sm:$0x1f] %vm193, 0.0
      $region32: #{nnpu_loss.1} parent=27 // pred_fallthru
        _
      %v195 = vld [vmem:[%s175] sm:$0xff]
      %v196 = vld [vmem:[%s182] sm:$0x3]
      %198 = vst [vmem:[#allocation1] ss:$2 sm:$0xff] %v195
      %v199 = vld.sshfl [vmem:[#allocation1] sm:$0xff pattern:$0x75316420]
      %v200 = vld.sshfl [vmem:[#allocation1 + $0x8] sm:$0xff pattern:$0x75316420]
      %vm203 = vcmask 1043456
      %v204 = vsel %vm203, %v199, -inf
      %v205 = vrot.slane %v204, 4
      %v206 = vmax.f32 %v204, %v205
      %v207 = vrot.slane %v206, 2
      %v208 = vmax.f32 %v206, %v207
      %v209 = vrot.slane %v208, 1
      %v210 = vmax.f32 %v208, %v209
      %v211 = vsel %vm203, %v200, -inf
      %v212 = vrot.slane %v211, 4
      %v213 = vmax.f32 %v211, %v212
      %v214 = vrot.slane %v213, 2
      %v215 = vmax.f32 %v213, %v214
      %v216 = vrot.slane %v215, 1
      %v217 = vmax.f32 %v215, %v216
      %v220 = vrot.slane %v217, 4
      %v221 = vsel %vm203, %v210, %v220
      %v223 = vsub.f32 %v195, %v221
      %v224 = vmul.f32 %v223, 1.442695
      %v225 = vpow.pop %v224
      %227 = vst [vmem:[#allocation1] ss:$2 sm:$0xff] %v225
      %v228 = vld.sshfl [vmem:[#allocation1] sm:$0xff pattern:$0x75316420]
      %v229 = vld.sshfl [vmem:[#allocation1 + $0x8] sm:$0xff pattern:$0x75316420]
      %v232 = vsel %vm203, %v228, 0.0
      %v233 = vrot.slane %v232, 4
      %v234 = vadd.f32 %v232, %v233
      %v235 = vrot.slane %v234, 2
      %v236 = vadd.f32 %v234, %v235
      %v237 = vrot.slane %v236, 1
      %v238 = vadd.f32 %v236, %v237
      %v239 = vsel %vm203, %v229, 0.0
      %v240 = vrot.slane %v239, 4
      %v241 = vadd.f32 %v239, %v240
      %v242 = vrot.slane %v241, 2
      %v243 = vadd.f32 %v241, %v242
      %v244 = vrot.slane %v243, 1
      %v245 = vadd.f32 %v243, %v244
      %v246 = vlog2.pop %v238
      %v247 = vmul.f32 %v246, 0.6931472
      %v248 = vlog2.pop %v245
      %v249 = vmul.f32 %v248, 0.6931472
      %v250 = vadd.f32 %v210, %v247
      %v251 = vadd.f32 %v217, %v249
      %252 = vst [vmem:[#allocation1] ss:$2 sm:$0xff] %v195
      %v253 = vld.sshfl [vmem:[#allocation1] sm:$0xff pattern:$0x75316420]
      %v254 = vld.sshfl [vmem:[#allocation1 + $0x8] sm:$0xff pattern:$0x75316420]
      %v257 = vsub.f32 %v250, %v253
      %v258 = vsub.f32 %v251, %v254
      %v259 = vlaneseq
      %v260 = vshrl.u32 %v259, 7
      %vm261 = vcmp.eq.s32.totalorder %v260, 4
      %v262 = vsel %vm261, 4294967295, %v260
      %v263 = vperm.slane %v196, 0
      %v264 = vperm.slane %v196, 1
      %vm265 = vcmp.eq.s32.totalorder %v263, %v262
      %vm266 = vcmp.eq.s32.totalorder %v264, %v262
      %v267 = vsel %vm265, 1, 0
      %v268 = vsel %vm266, 1, 0
      %v269 = vcvt.s32.f32 %v267
      %v270 = vcvt.s32.f32 %v268
      %v271 = vsel %vm203, %v257, 1.0
      %v272 = vsel %vm203, %v258, 1.0
      %v273 = vld [vmem:[%s188] sm:$0x1f]
      %274 = vmatpush.xpose.msra.mxu0 0.0
      %275 = vmatpush.xpose.msra.mxu0 0.0
      %276 = vmatpush.xpose.msra.mxu0 0.0
      %277 = vmatpush.xpose.msra.mxu0 0.0
      %278 = vmatpush.xpose.msra.mxu0 0.0
      %279 = vmatpush.xpose.msra.mxu0 0.0
      %280 = vmatpush.xpose.msra.mxu0 0.0
      %281 = vmatpush.xpose.msra.mxu0 0.0
      %282 = vmatpush.xpose.msra.mxu0 0.0
      %283 = vmatpush.xpose.msra.mxu0 0.0
      %284 = vmatpush.xpose.msra.mxu0 0.0
      %285 = vmatpush.xpose.msra.mxu0 0.0
      %286 = vmatpush.xpose.msra.mxu0 0.0
      %287 = vmatpush.xpose.msra.mxu0 0.0
      %288 = vmatpush.xpose.msra.mxu0 0.0
      %289 = vmatpush.xpose.msra.mxu0 %v271
      %290 = vmatmul.f32.gmra.mxu0 %v269
      %v291 = vpop.f32.mrf.mxu0
      %v292 = vadd.f32 0.0, %v291
      %293 = vdwg.mxu0
      %294 = vmatpush.xpose.msra.mxu0 0.0
      %295 = vmatpush.xpose.msra.mxu0 0.0
      %296 = vmatpush.xpose.msra.mxu0 0.0
      %297 = vmatpush.xpose.msra.mxu0 0.0
      %298 = vmatpush.xpose.msra.mxu0 0.0
      %299 = vmatpush.xpose.msra.mxu0 0.0
      %300 = vmatpush.xpose.msra.mxu0 0.0
      %301 = vmatpush.xpose.msra.mxu0 0.0
      %302 = vmatpush.xpose.msra.mxu0 0.0
      %303 = vmatpush.xpose.msra.mxu0 0.0
      %304 = vmatpush.xpose.msra.mxu0 0.0
      %305 = vmatpush.xpose.msra.mxu0 0.0
      %306 = vmatpush.xpose.msra.mxu0 0.0
      %307 = vmatpush.xpose.msra.mxu0 0.0
      %308 = vmatpush.xpose.msra.mxu0 0.0
      %309 = vmatpush.xpose.msra.mxu0 %v272
      %310 = vmatmul.f32.gmra.mxu0 %v270
      %v311 = vpop.f32.mrf.mxu0
      %v312 = vadd.f32 %v292, %v311
      %313 = vdwg.mxu0
      %v314 = vadd.f32 %v273, %v312
      %vm315 = vcmask 36864
      %316 = vst.msk [vmem:[%s188] sm:$0x1f] %vm315, %v314
      %p317 = scmp.lt.s32.totalorder %s17, 1
      %s318 = scalar_select %p317, %s17, 1
      %s319 = smul.addr %s318, 8
      %s320 = scalar_lea.vmem %s2, %s319
      // Predicated region
      $region33: #{nnpu_loss.1} parent=27 // pred_check
        %p321 = pneg %p99
      $region34: #{nnpu_loss.1} parent=27 // pred_check_branch
        %323 = sbr.rel (%p321) target = $region36
      $region35: #{nnpu_loss.1} parent=27 // pred_region
        _
      $region36: #{nnpu_loss.1} parent=27 // pred_fallthru
        _
    $region28: #{nnpu_loss.1} parent=5 // pred_fallthru
      _
    %p324 = scmp.le.s32.totalorder 2, %s8
    // Predicated region
    $region37: #{nnpu_loss.1} parent=5 // pred_check
      %p325 = pneg %p324
    $region38: #{nnpu_loss.1} parent=5 // pred_check_branch
      %327 = sbr.rel (%p325) target = $region40
    $region39: #{nnpu_loss.1} parent=5 // pred_region
      %s328 = ssub.s32 %s8, 2
      // Predicated region
      $region41: #{nnpu_loss.1} parent=39 // pred_check
        %p329 = pneg %p105
      $region42: #{nnpu_loss.1} parent=39 // pred_check_branch
        %331 = sbr.rel (%p329) target = $region44
      $region43: #{nnpu_loss.1} parent=39 // pred_region
        %p332 = scmp.lt.s32.totalorder %s19, 1
        %s333 = scalar_select %p332, %s19, 1
        %s334 = smul.addr %s333, 8
        %s335 = scalar_lea.vmem %s2, %s334
      $region44: #{nnpu_loss.1} parent=39 // pred_fallthru
        _
    $region40: #{nnpu_loss.1} parent=5 // pred_fallthru
      _
  $region6: #{nnpu_loss.1} parent=0 // loop_footer
    %s12 = sadd.s32 1, %s8
  $region7: #{nnpu_loss.1} parent=0 // loop_footer_branch
    %7 = sbr.rel target = $region3
  $region8: #{nnpu_loss.1} parent=0 // loop_exit
    _

</llo_original>
